<compile_context>
chip_gen: v7x
topology: tpu7x:2x2x1
jax: 0.10.0
libtpu: 0.0.40
codegen_flags: <defaults>
</compile_context>

<pallas_src>
import jax
import jax.numpy as jnp
from jax.experimental import pallas as pl
from jax.experimental.pallas import tpu as pltpu

HID_PAD = 128  # hidden dim padded to one full lane width -> lane-dense h, fc2 K = 128


def subnet_kernel(x_ref, w1_ref, w2_ref, b1_ref, b2_ref, o_ref):
    # fc1: (TB, d_in) @ (d_in, 128) on the MXU, f32 accumulate. d_in = 100 is fine:
    # the MXU pads K internally, so x does not need host-side lane padding.
    h = jnp.dot(x_ref[...], w1_ref[...], preferred_element_type=jnp.float32)
    # bias + ReLU on the VPU (full-vreg, 128-lane dense); padded hidden lanes stay 0.
    h = jnp.maximum(h + b1_ref[...], 0.0)
    # fc2: (TB, 128) @ (128, d_out) -> compact (TB, d_out) result, so the HBM
    # writeback is d_out columns (40 B/row) instead of a 128-wide slab + post-slice.
    out = jnp.dot(h.astype(w2_ref.dtype), w2_ref[...],
                  preferred_element_type=jnp.float32)
    o_ref[...] = (out + b2_ref[...]).astype(o_ref.dtype)


def prepare_subnet_params(w1, b1, w2, b2, *, dtype=jnp.float32):
    """Pad/pack params ONCE (not per call).

    w1: (d_in, d_hid), b1: (d_hid,), w2: (d_hid, d_out), b2: (d_out,)
    (weights stored as (in_features, out_features), i.e. transposed vs torch).
    `dtype` is the streamed weight dtype: f32 (exact) or bf16 (halves weight/x bytes,
    native MXU rate on v5e/v6e/v7x; pair with bf16 activations upstream).
    Biases stay f32: exact VPU adds, and v5e has no bf16 VALU anyway.
    """
    d_in, d_hid = w1.shape
    _, d_out = w2.shape
    w1_p = jnp.zeros((d_in, HID_PAD), dtype).at[:, :d_hid].set(w1.astype(dtype))
    w2_p = jnp.zeros((HID_PAD, d_out), dtype).at[:d_hid, :].set(w2.astype(dtype))
    b1_p = jnp.zeros((1, HID_PAD), jnp.float32).at[0, :d_hid].set(b1.astype(jnp.float32))
    b2_p = b2.astype(jnp.float32).reshape(1, d_out)
    return w1_p, w2_p, b1_p, b2_p


def subnet_forward_prepared(x, w1_p, w2_p, b1_p, b2_p, *, tb=1024):
    """x: (B, d_in); params from prepare_subnet_params. Returns (B, d_out) f32."""
    B, d_in = x.shape
    assert w1_p.shape[0] == d_in, (w1_p.shape, d_in)
    d_out = w2_p.shape[1]

    # ---- batch-tile selection (mem/overhead-bound regime) --------------------
    # tb multiple of 8 (f32 sublane); default 1024 amortizes the ~0.35 us/step
    # overhead; cap 8192 keeps double-buffered x+out tiles ~< 10 MiB (safe on
    # v7x's 64 MiB VMEM without vmem_limit_bytes); force >= 2 grid steps when
    # there are >= 16 rows so v7x's two TensorCores both get work.
    n_rows8 = pl.cdiv(B, 8) * 8
    tb = max(8, min(tb, 8192))
    tb = min(tb, n_rows8)
    if n_rows8 >= 16:
        tb = min(tb, max(8, ((n_rows8 // 2) // 8) * 8))
    grid = (pl.cdiv(B, tb),)

    bpe_x = x.dtype.itemsize
    bpe_w = w1_p.dtype.itemsize
    cost = pl.CostEstimate(
        flops=2 * B * (d_in * HID_PAD + HID_PAD * d_out),
        transcendentals=0,
        bytes_accessed=(x.size * bpe_x
                        + (w1_p.size + w2_p.size) * bpe_w
                        + (b1_p.size + b2_p.size) * 4
                        + B * d_out * 4),
    )

    return pl.pallas_call(
        subnet_kernel,
        out_shape=jax.ShapeDtypeStruct((B, d_out), jnp.float32),
        grid_spec=pl.GridSpec(
            grid=grid,
            in_specs=[
                # x tile walks the batch axis; last (ragged) tile handled by Pallas.
                pl.BlockSpec((tb, d_in), lambda i: (i, 0)),
                # Weights / biases: constant block index -> VMEM-resident all steps.
                pl.BlockSpec((d_in, HID_PAD), lambda i: (0, 0)),
                pl.BlockSpec((HID_PAD, d_out), lambda i: (0, 0)),
                pl.BlockSpec((1, HID_PAD), lambda i: (0, 0)),
                pl.BlockSpec((1, d_out), lambda i: (0, 0)),
            ],
            out_specs=pl.BlockSpec((tb, d_out), lambda i: (i, 0)),
        ),
        compiler_params=pltpu.CompilerParams(
            # Batch steps are independent -> shard across v7x's 2 TCs; neutral elsewhere.
            dimension_semantics=("parallel",),
        ),
        cost_estimate=cost,
    )(x, w1_p, w2_p, b1_p, b2_p)


def subnet_forward(x, w1, b1, w2, b2, *, tb=1024, dtype=jnp.float32):
    """Convenience wrapper: un-padded params in, (B, 10) f32 out."""
    w1_p, w2_p, b1_p, b2_p = prepare_subnet_params(w1, b1, w2, b2, dtype=dtype)
    return subnet_forward_prepared(x, w1_p, w2_p, b1_p, b2_p, tb=tb)


def subnet_ref(x, w1, b1, w2, b2):
    h = jnp.maximum(x @ w1 + b1, 0.0)
    return h @ w2 + b2


if __name__ == "__main__":
    key = jax.random.PRNGKey(0)
    k_x, k_w1, k_b1, k_w2, k_b2, k_x2 = jax.random.split(key, 6)

    B, D_in, D_hid, D_out = 8, 100, 100, 10

    x = jax.random.normal(k_x, (B, D_in), dtype=jnp.float32)

    # Deterministic PyTorch-nn.Linear-like init, stored as (in_features, out_features).
    lim1 = 1.0 / jnp.sqrt(jnp.float32(D_in))
    w1 = jax.random.uniform(k_w1, (D_in, D_hid), jnp.float32, -lim1, lim1)
    b1 = jax.random.uniform(k_b1, (D_hid,), jnp.float32, -lim1, lim1)

    lim2 = 1.0 / jnp.sqrt(jnp.float32(D_hid))
    w2 = jax.random.uniform(k_w2, (D_hid, D_out), jnp.float32, -lim2, lim2)
    b2 = jax.random.uniform(k_b2, (D_out,), jnp.float32, -lim2, lim2)

    # Small-batch f32 check (single grid step).
    out = jax.block_until_ready(subnet_forward(x, w1, b1, w2, b2))
    ref = subnet_ref(x, w1, b1, w2, b2)
    assert out.shape == (B, D_out), out.shape
    assert jnp.allclose(out, ref, atol=1e-5, rtol=1e-5), "mismatch vs reference (B=8)"

    # Larger batch: exercises >=2 grid steps + ragged last tile (no host-side pad of x).
    B2 = 300
    x2 = jax.random.normal(k_x2, (B2, D_in), dtype=jnp.float32)
    out2 = jax.block_until_ready(subnet_forward(x2, w1, b1, w2, b2))
    ref2 = subnet_ref(x2, w1, b1, w2, b2)
    assert out2.shape == (B2, D_out), out2.shape
    assert jnp.allclose(out2, ref2, atol=1e-5, rtol=1e-5), "mismatch vs reference (B=300)"

    # bf16 streaming path (halved HBM bytes for x + weights; f32 accumulate + f32 bias).
    x2_bf16 = x2.astype(jnp.bfloat16)  # stand-in for bf16 activations arriving upstream
    out_bf16 = jax.block_until_ready(
        subnet_forward(x2_bf16, w1, b1, w2, b2, dtype=jnp.bfloat16))
    assert out_bf16.shape == (B2, D_out), out_bf16.shape
    assert jnp.allclose(out_bf16, ref2, atol=5e-2, rtol=5e-2), "bf16 path mismatch"

    print("KERNEL_OK")
</pallas_src>

<mosaic_0001>
module attributes {stable_mosaic.version = 11 : i64} {
  func.func @subnet_kernel(%arg0: i32, %arg1: memref<8x100xf32, #tpu.memory_space<vmem>>, %arg2: memref<100x128xf32, #tpu.memory_space<vmem>>, %arg3: memref<128x10xf32, #tpu.memory_space<vmem>>, %arg4: memref<1x128xf32, #tpu.memory_space<vmem>>, %arg5: memref<1x10xf32, #tpu.memory_space<vmem>>, %arg6: memref<8x10xf32, #tpu.memory_space<vmem>>) attributes {dimension_semantics = [#tpu.dimension_semantics<parallel>], iteration_bounds = array<i64: 1>, scalar_prefetch = 0 : i64, scratch_operands = 0 : i64, tpu.core_type = #tpu.core_type<tc>, window_params = [{transform_indices = @transform_0, window_bounds = array<i64: 8, 100>}, {pipeline_mode = #tpu.pipeline_mode<synchronous>, transform_indices = @transform_1, window_bounds = array<i64: 100, 128>}, {pipeline_mode = #tpu.pipeline_mode<synchronous>, transform_indices = @transform_2, window_bounds = array<i64: 128, 10>}, {pipeline_mode = #tpu.pipeline_mode<synchronous>, transform_indices = @transform_3, window_bounds = array<i64: 1, 128>}, {pipeline_mode = #tpu.pipeline_mode<synchronous>, transform_indices = @transform_4, window_bounds = array<i64: 1, 10>}, {transform_indices = @transform_5, window_bounds = array<i64: 8, 10>}]} {
    %c0 = arith.constant 0 : index
    %c0_0 = arith.constant 0 : index
    %0 = vector.load %arg1[%c0, %c0_0] : memref<8x100xf32, #tpu.memory_space<vmem>>, vector<8x100xf32>
    %c0_1 = arith.constant 0 : index
    %c0_2 = arith.constant 0 : index
    %1 = vector.load %arg2[%c0_1, %c0_2] : memref<100x128xf32, #tpu.memory_space<vmem>>, vector<100x128xf32>
    %cst = arith.constant dense<0.000000e+00> : vector<8x128xf32>
    %2 = tpu.matmul %0, %1, %cst {dimension_numbers = #tpu.dot_dimension_numbers<[1], [0], [0], [1], [0, 0, 1, 1], [], []>} : vector<8x100xf32>, vector<100x128xf32>, vector<8x128xf32> -> vector<8x128xf32>
    %c0_3 = arith.constant 0 : index
    %c0_4 = arith.constant 0 : index
    %3 = vector.load %arg4[%c0_3, %c0_4] : memref<1x128xf32, #tpu.memory_space<vmem>>, vector<1x128xf32>
    %4 = vector.broadcast %3 : vector<1x128xf32> to vector<8x128xf32>
    %5 = arith.addf %2, %4 : vector<8x128xf32>
    %cst_5 = arith.constant 0.000000e+00 : f32
    %6 = vector.broadcast %cst_5 : f32 to vector<8x128xf32>
    %7 = arith.maximumf %5, %6 : vector<8x128xf32>
    %c0_6 = arith.constant 0 : index
    %c0_7 = arith.constant 0 : index
    %8 = vector.load %arg3[%c0_6, %c0_7] : memref<128x10xf32, #tpu.memory_space<vmem>>, vector<128x10xf32>
    %cst_8 = arith.constant dense<0.000000e+00> : vector<8x10xf32>
    %9 = tpu.matmul %7, %8, %cst_8 {dimension_numbers = #tpu.dot_dimension_numbers<[1], [0], [0], [1], [0, 0, 1, 1], [], []>} : vector<8x128xf32>, vector<128x10xf32>, vector<8x10xf32> -> vector<8x10xf32>
    %c0_9 = arith.constant 0 : index
    %c0_10 = arith.constant 0 : index
    %10 = vector.load %arg5[%c0_9, %c0_10] : memref<1x10xf32, #tpu.memory_space<vmem>>, vector<1x10xf32>
    %11 = vector.broadcast %10 : vector<1x10xf32> to vector<8x10xf32>
    %12 = arith.addf %9, %11 : vector<8x10xf32>
    %c0_11 = arith.constant 0 : index
    %c0_12 = arith.constant 0 : index
    %13 = vector.load %arg6[%c0_11, %c0_12] : memref<8x10xf32, #tpu.memory_space<vmem>>, vector<8x10xf32>
    tpu.vector_store %arg6[%c0_11, %c0_12], %12 {strides = array<i32>} : memref<8x10xf32, #tpu.memory_space<vmem>>, vector<8x10xf32>,
    return
  }
  func.func @transform_0(%arg0: i32) -> (i32, i32) {
    %c0_i32 = arith.constant 0 : i32
    %c0_i32_0 = arith.constant 0 : i32
    return %arg0, %c0_i32 : i32, i32
  }
  func.func @transform_1(%arg0: i32) -> (i32, i32) {
    %c0_i32 = arith.constant 0 : i32
    %c0_i32_0 = arith.constant 0 : i32
    %c0_i32_1 = arith.constant 0 : i32
    return %c0_i32, %c0_i32_0 : i32, i32
  }
  func.func @transform_2(%arg0: i32) -> (i32, i32) {
    %c0_i32 = arith.constant 0 : i32
    %c0_i32_0 = arith.constant 0 : i32
    %c0_i32_1 = arith.constant 0 : i32
    return %c0_i32, %c0_i32_0 : i32, i32
  }
  func.func @transform_3(%arg0: i32) -> (i32, i32) {
    %c0_i32 = arith.constant 0 : i32
    %c0_i32_0 = arith.constant 0 : i32
    %c0_i32_1 = arith.constant 0 : i32
    return %c0_i32, %c0_i32_0 : i32, i32
  }
  func.func @transform_4(%arg0: i32) -> (i32, i32) {
    %c0_i32 = arith.constant 0 : i32
    %c0_i32_0 = arith.constant 0 : i32
    %c0_i32_1 = arith.constant 0 : i32
    return %c0_i32, %c0_i32_0 : i32, i32
  }
  func.func @transform_5(%arg0: i32) -> (i32, i32) {
    %c0_i32 = arith.constant 0 : i32
    %c0_i32_0 = arith.constant 0 : i32
    return %arg0, %c0_i32 : i32, i32
  }
}

</mosaic_0001>

<llo_original>
// kernel: tpu_custom_call.1
$region0: #{tpu_custom_call.1}
  #allocation0 [shape = 'u32[]', space=smem, size = 0x4, offset = 0x4, fixed_abs, tag = 'smem constant byte address 0x4 - core index']
  #allocation1 [shape = 'u32[144,128]{1,0:T(1,128)}', space=vmem, size = 0x12000, scoped, tag = 'internal scratch']
  %s0 = inlined_call_operand.vmem [shape: f32[8,100], index: 0, kind: input, shape index: {}]
  %s1 = inlined_call_operand.vmem [shape: f32[100,128], index: 1, kind: input, shape index: {}]
  %s2 = inlined_call_operand.vmem [shape: f32[128,10], index: 2, kind: input, shape index: {}]
  %s3 = inlined_call_operand.vmem [shape: f32[1,128], index: 3, kind: input, shape index: {}]
  %s4 = inlined_call_operand.vmem [shape: f32[1,10], index: 4, kind: input, shape index: {}]
  %s5 = inlined_call_operand.hbm [shape: f32[8,10], index: 5, kind: output, shape index: {}]
  %s6 = sld [smem:[#allocation0]]
  $region30: #{tpu_custom_call.1} parent=0
    _
  %s8 = ssub.s32 1, %s6
  %s9 = scalar_select 0, %s8, %s6
  $region1: #{tpu_custom_call.1} parent=0
    #allocation2 [shape = 'u8[4096]{0}', space=vmem, size = 0x1000, scoped, tag = 'output window, operand 0, single buffered']
    #allocation3 [shape = 's32[1]{0}', space=sflag, size = 0x4, scoped, tag = 'scoped memory for tpu_custom_call.1']
    %10 = vsyncpa [#allocation3], 0
    // Predicated region
    $region2: #{tpu_custom_call.1} parent=1 // pred_check
      _
    $region3: #{tpu_custom_call.1} parent=1 // pred_check_branch
      %12 = sbr.rel (0) target = $region5
    $region4: #{tpu_custom_call.1} parent=1 // pred_region
      _
    $region5: #{tpu_custom_call.1} parent=1 // pred_fallthru
      _
    // Predicated region
    $region6: #{tpu_custom_call.1} parent=1 // pred_check
      _
    $region7: #{tpu_custom_call.1} parent=1 // pred_check_branch
      %14 = sbr.rel (0) target = $region9
    $region8: #{tpu_custom_call.1} parent=1 // pred_region
      _
    $region9: #{tpu_custom_call.1} parent=1 // pred_fallthru
      _
    // Predicated region
    $region10: #{tpu_custom_call.1} parent=1 // pred_check
      _
    $region11: #{tpu_custom_call.1} parent=1 // pred_check_branch
      %16 = sbr.rel (0) target = $region13
    $region12: #{tpu_custom_call.1} parent=1 // pred_region
      _
    $region13: #{tpu_custom_call.1} parent=1 // pred_fallthru
      _
    // Predicated region
    $region14: #{tpu_custom_call.1} parent=1 // pred_check
      _
    $region15: #{tpu_custom_call.1} parent=1 // pred_check_branch
      %18 = sbr.rel (0) target = $region17
    $region16: #{tpu_custom_call.1} parent=1 // pred_region
      _
    $region17: #{tpu_custom_call.1} parent=1 // pred_fallthru
      _
    // Predicated region
    $region18: #{tpu_custom_call.1} parent=1 // pred_check
      _
    $region19: #{tpu_custom_call.1} parent=1 // pred_check_branch
      %20 = sbr.rel (0) target = $region21
    $region20: #{tpu_custom_call.1} parent=1 // pred_region
      _
    $region21: #{tpu_custom_call.1} parent=1 // pred_fallthru
      _
    %v21 = vld [vmem:[%s0] sm:$0xff]
    %v22 = vld [vmem:[%s1] sm:$0xff]
    %v23 = vld [vmem:[%s1 + $0x8] sm:$0xff]
    %v24 = vld [vmem:[%s1 + $0x10] sm:$0xff]
    %v25 = vld [vmem:[%s1 + $0x18] sm:$0xff]
    %v26 = vld [vmem:[%s1 + $0x20] sm:$0xff]
    %v27 = vld [vmem:[%s1 + $0x28] sm:$0xff]
    %v28 = vld [vmem:[%s1 + $0x30] sm:$0xff]
    %v29 = vld [vmem:[%s1 + $0x38] sm:$0xff]
    %v30 = vld [vmem:[%s1 + $0x40] sm:$0xff]
    %v31 = vld [vmem:[%s1 + $0x48] sm:$0xff]
    %v32 = vld [vmem:[%s1 + $0x50] sm:$0xff]
    %v33 = vld [vmem:[%s1 + $0x58] sm:$0xff]
    %v34 = vld [vmem:[%s1 + $0x60] sm:$0xf]
    %v35 = vld [vmem:[%s3] sm:$0x1]
    %v37 = vlaneseq
    %v38 = vshrl.u32 %v37, 7
    %v39 = vsub.s32 0, %v38
    %v40 = vrot.slane %v35, %v39
    %vm42 = vcmask 818176
    %v44 = vsel %vm42, %v21, 0
    %vm46 = vcmask 1043456
    %v48 = vsel %vm46, %v34, 0
    %50 = vmatprep.subr.mxu0 0.0
    %51 = vmatpush1.msra.mxu0 %v22
    %52 = vmatprep.subr.mxu0 0.0
    %53 = vmatpush1.msra.mxu0 %v23
    %54 = vmatprep.subr.mxu0 0.0
    %55 = vmatpush1.msra.mxu0 %v24
    %56 = vmatprep.subr.mxu0 0.0
    %57 = vmatpush1.msra.mxu0 %v25
    %58 = vmatprep.subr.mxu0 0.0
    %59 = vmatpush1.msra.mxu0 %v26
    %60 = vmatprep.subr.mxu0 0.0
    %61 = vmatpush1.msra.mxu0 %v27
    %62 = vmatprep.subr.mxu0 0.0
    %63 = vmatpush1.msra.mxu0 %v28
    %64 = vmatprep.subr.mxu0 0.0
    %65 = vmatpush1.msra.mxu0 %v29
    %66 = vmatprep.subr.mxu0 0.0
    %67 = vmatpush1.msra.mxu0 %v30
    %68 = vmatprep.subr.mxu0 0.0
    %69 = vmatpush1.msra.mxu0 %v31
    %70 = vmatprep.subr.mxu0 0.0
    %71 = vmatpush1.msra.mxu0 %v32
    %72 = vmatprep.subr.mxu0 0.0
    %73 = vmatpush1.msra.mxu0 %v33
    %74 = vmatprep.subr.mxu0 0.0
    %75 = vmatpush1.msra.mxu0 %v48
    %76 = vmatprep.subr.mxu0 0.0
    %77 = vmatpush1.msra.mxu0 0.0
    %78 = vmatprep.subr.mxu0 0.0
    %79 = vmatpush1.msra.mxu0 0.0
    %80 = vmatprep.subr.mxu0 0.0
    %81 = vmatpush1.msra.mxu0 0.0
    %82 = vmatprep.subr.mxu0 0.0
    %83 = vmatpush1.msra.mxu0 0.0
    %84 = vmatprep.subr.mxu0 0.0
    %85 = vmatpush1.msra.mxu0 0.0
    %86 = vmatprep.subr.mxu0 0.0
    %87 = vmatpush1.msra.mxu0 0.0
    %88 = vmatprep.subr.mxu0 0.0
    %89 = vmatpush1.msra.mxu0 0.0
    %90 = vmatprep.subr.mxu0 0.0
    %91 = vmatpush1.msra.mxu0 0.0
    %92 = vmatprep.subr.mxu0 0.0
    %93 = vmatpush1.msra.mxu0 0.0
    %94 = vmatprep.subr.mxu0 0.0
    %95 = vmatpush1.msra.mxu0 0.0
    %96 = vmatprep.subr.mxu0 0.0
    %97 = vmatpush1.msra.mxu0 0.0
    %98 = vmatprep.subr.mxu0 0.0
    %99 = vmatpush1.msra.mxu0 0.0
    %100 = vmatprep.subr.mxu0 0.0
    %101 = vmatpush1.msra.mxu0 0.0
    %102 = vmatprep.subr.mxu0 0.0
    %103 = vmatpush1.msra.mxu0 0.0
    %104 = vmatprep.subr.mxu0 0.0
    %105 = vmatpush1.msra.mxu0 0.0
    %106 = vmatprep.subr.mxu0 0.0
    %107 = vmatpush1.msra.mxu0 0.0
    %108 = vmatprep.subr.mxu0 0.0
    %109 = vmatpush1.msra.mxu0 0.0
    %110 = vmatprep.subr.mxu0 0.0
    %111 = vmatpush1.msra.mxu0 0.0
    %112 = vmatprep.subr.mxu0 0.0
    %113 = vmatpush1.msra.mxu0 0.0
    %114 = vmatprep.mubr.f32.mxu0 0.0
    %115 = vmatmul.mubr.f32.gmra.mrb[0].mxu0 %v44
    %v116 = vpop.f32.mrb[0].mxu0
    %v117 = vadd.f32 %v40, %v116
    %v118 = vpop.f32.mrb[0].mxu0
    %119 = vdwg.mxu0
    %v120 = vmax.f32 %v117, 0.0
    %v121 = vld [vmem:[%s2] sm:$0xff]
    %v122 = vld [vmem:[%s2 + $0x8] sm:$0xff]
    %v123 = vld [vmem:[%s2 + $0x10] sm:$0xff]
    %v124 = vld [vmem:[%s2 + $0x18] sm:$0xff]
    %v125 = vld [vmem:[%s2 + $0x20] sm:$0xff]
    %v126 = vld [vmem:[%s2 + $0x28] sm:$0xff]
    %v127 = vld [vmem:[%s2 + $0x30] sm:$0xff]
    %v128 = vld [vmem:[%s2 + $0x38] sm:$0xff]
    %v129 = vld [vmem:[%s2 + $0x40] sm:$0xff]
    %v130 = vld [vmem:[%s2 + $0x48] sm:$0xff]
    %v131 = vld [vmem:[%s2 + $0x50] sm:$0xff]
    %v132 = vld [vmem:[%s2 + $0x58] sm:$0xff]
    %v133 = vld [vmem:[%s2 + $0x60] sm:$0xff]
    %v134 = vld [vmem:[%s2 + $0x68] sm:$0xff]
    %v135 = vld [vmem:[%s2 + $0x70] sm:$0xff]
    %v136 = vld [vmem:[%s2 + $0x78] sm:$0xff]
    %v137 = vld [vmem:[%s4] sm:$0x1]
    %v139 = vlaneseq
    %v140 = vshrl.u32 %v139, 7
    %v141 = vsub.s32 0, %v140
    %v142 = vrot.slane %v137, %v141
    %144 = vmatprep.subr.mxu0 0.0
    %145 = vmatpush1.msra.mxu0 %v121
    %146 = vmatprep.subr.mxu0 0.0
    %147 = vmatpush1.msra.mxu0 %v122
    %148 = vmatprep.subr.mxu0 0.0
    %149 = vmatpush1.msra.mxu0 %v123
    %150 = vmatprep.subr.mxu0 0.0
    %151 = vmatpush1.msra.mxu0 %v124
    %152 = vmatprep.subr.mxu0 0.0
    %153 = vmatpush1.msra.mxu0 %v125
    %154 = vmatprep.subr.mxu0 0.0
    %155 = vmatpush1.msra.mxu0 %v126
    %156 = vmatprep.subr.mxu0 0.0
    %157 = vmatpush1.msra.mxu0 %v127
    %158 = vmatprep.subr.mxu0 0.0
    %159 = vmatpush1.msra.mxu0 %v128
    %160 = vmatprep.subr.mxu0 0.0
    %161 = vmatpush1.msra.mxu0 %v129
    %162 = vmatprep.subr.mxu0 0.0
    %163 = vmatpush1.msra.mxu0 %v130
    %164 = vmatprep.subr.mxu0 0.0
    %165 = vmatpush1.msra.mxu0 %v131
    %166 = vmatprep.subr.mxu0 0.0
    %167 = vmatpush1.msra.mxu0 %v132
    %168 = vmatprep.subr.mxu0 0.0
    %169 = vmatpush1.msra.mxu0 %v133
    %170 = vmatprep.subr.mxu0 0.0
    %171 = vmatpush1.msra.mxu0 %v134
    %172 = vmatprep.subr.mxu0 0.0
    %173 = vmatpush1.msra.mxu0 %v135
    %174 = vmatprep.subr.mxu0 0.0
    %175 = vmatpush1.msra.mxu0 %v136
    %176 = vmatprep.subr.mxu0 0.0
    %177 = vmatpush1.msra.mxu0 0.0
    %178 = vmatprep.subr.mxu0 0.0
    %179 = vmatpush1.msra.mxu0 0.0
    %180 = vmatprep.subr.mxu0 0.0
    %181 = vmatpush1.msra.mxu0 0.0
    %182 = vmatprep.subr.mxu0 0.0
    %183 = vmatpush1.msra.mxu0 0.0
    %184 = vmatprep.subr.mxu0 0.0
    %185 = vmatpush1.msra.mxu0 0.0
    %186 = vmatprep.subr.mxu0 0.0
    %187 = vmatpush1.msra.mxu0 0.0
    %188 = vmatprep.subr.mxu0 0.0
    %189 = vmatpush1.msra.mxu0 0.0
    %190 = vmatprep.subr.mxu0 0.0
    %191 = vmatpush1.msra.mxu0 0.0
    %192 = vmatprep.subr.mxu0 0.0
    %193 = vmatpush1.msra.mxu0 0.0
    %194 = vmatprep.subr.mxu0 0.0
    %195 = vmatpush1.msra.mxu0 0.0
    %196 = vmatprep.subr.mxu0 0.0
    %197 = vmatpush1.msra.mxu0 0.0
    %198 = vmatprep.subr.mxu0 0.0
    %199 = vmatpush1.msra.mxu0 0.0
    %200 = vmatprep.subr.mxu0 0.0
    %201 = vmatpush1.msra.mxu0 0.0
    %202 = vmatprep.subr.mxu0 0.0
    %203 = vmatpush1.msra.mxu0 0.0
    %204 = vmatprep.subr.mxu0 0.0
    %205 = vmatpush1.msra.mxu0 0.0
    %206 = vmatprep.subr.mxu0 0.0
    %207 = vmatpush1.msra.mxu0 0.0
    %208 = vmatprep.mubr.f32.mxu0 0.0
    %209 = vmatmul.mubr.f32.gmra.mrb[0].mxu0 %v120
    %v210 = vpop.f32.mrb[0].mxu0
    %v211 = vadd.f32 %v142, %v210
    %v212 = vpop.f32.mrb[0].mxu0
    %213 = vdwg.mxu0
    %vm214 = vcmask 80896
    %215 = vst.msk [vmem:[#allocation2] sm:$0xff] %vm214, %v211
    // Predicated region
    $region22: #{tpu_custom_call.1} parent=1 // pred_check
      _
    $region23: #{tpu_custom_call.1} parent=1 // pred_check_branch
      %217 = sbr.rel (0) target = $region25
    $region24: #{tpu_custom_call.1} parent=1 // pred_region
      %s219 = ssub.s32 128, 128
      %220 = vsyncadd [#allocation3], %s219
      %s222 = sshll.u32 [#allocation2], 4
      %s223 = int_to_ptr.vmem [resolvable:$true] %s222
      %225 = dma.vmem_to_hbm [thread:$0]  %s223, 128, %s5, [#allocation3]
    $region25: #{tpu_custom_call.1} parent=1 // pred_fallthru
      _
    // Predicated region
    $region26: #{tpu_custom_call.1} parent=1 // pred_check
      _
    $region27: #{tpu_custom_call.1} parent=1 // pred_check_branch
      %227 = sbr.rel (0) target = $region29
    $region28: #{tpu_custom_call.1} parent=1 // pred_region
      %228 = dma.done [#allocation3], 128
    $region29: #{tpu_custom_call.1} parent=1 // pred_fallthru
      _
    %229 = vsyncpa [#allocation3], 1

</llo_original>
